<compile_context>
chip_gen: v7x
topology: tpu7x:2x2x1
jax: 0.10.0
libtpu: 0.0.40
codegen_flags: <defaults>
</compile_context>

<pallas_src>
import jax
import jax.numpy as jnp
from jax.experimental import pallas as pl
from jax.experimental.pallas import tpu as pltpu

EPS = 1e-6


def _round_up(n, m):
    return ((n + m - 1) // m) * m


# ---------------------------------------------------------------------------
# Kernel bodies
# ---------------------------------------------------------------------------

def _resident_kernel(x_ref, a_ref, b_ref, w_ref, wb_ref, o_ref):
    """Weight fully resident (nc == 1): one pass per row tile, no scratch."""
    x = x_ref[...].astype(jnp.float32)
    d = x.shape[-1]
    mean = jnp.mean(x, axis=-1, keepdims=True)
    diff = x - mean
    # torch.Tensor.std -> unbiased estimator (ddof = 1); eps added to std.
    var = jnp.sum(diff * diff, axis=-1, keepdims=True) * (1.0 / (d - 1))
    inv = pl.reciprocal(jnp.sqrt(var) + EPS, approx=True)   # EUP slot, ~free
    normed = a_ref[...] * (diff * inv) + b_ref[...]
    sub = jnp.dot(normed.astype(w_ref.dtype), w_ref[...],
                  preferred_element_type=jnp.float32)
    sub = sub + wb_ref[...].astype(jnp.float32)
    o_ref[...] = (x + sub).astype(o_ref.dtype)


def _tiled_kernel(x_ref, a_ref, b_ref, w_ref, wb_ref, o_ref, normed_ref):
    """Weight column-tiled (nc > 1): LayerNorm cached in VMEM scratch."""
    j = pl.program_id(1)
    tn = o_ref.shape[-1]

    # LayerNorm depends only on the row tile: compute it once (j == 0) and
    # reuse the VMEM-resident result for every weight-column tile.
    @pl.when(j == 0)
    def _():
        x = x_ref[...].astype(jnp.float32)
        d = x.shape[-1]
        mean = jnp.mean(x, axis=-1, keepdims=True)
        diff = x - mean
        var = jnp.sum(diff * diff, axis=-1, keepdims=True) * (1.0 / (d - 1))
        inv = pl.reciprocal(jnp.sqrt(var) + EPS, approx=True)
        normed = a_ref[...] * (diff * inv) + b_ref[...]
        normed_ref[...] = normed.astype(normed_ref.dtype)

    # Sublayer (Linear D->D), column tile j: (tm, D) @ (D, tn) on the MXU.
    sub = jnp.dot(normed_ref[...], w_ref[0], preferred_element_type=jnp.float32)
    sub = sub + wb_ref[...].astype(jnp.float32)

    # Residual columns sliced in-VMEM out of the already-resident full-width
    # x tile (x is DMA'd from HBM exactly once per row tile).
    col = pl.multiple_of(j * tn, 128)
    resid = x_ref[:, pl.ds(col, tn)].astype(jnp.float32)
    o_ref[...] = (resid + sub).astype(o_ref.dtype)


# ---------------------------------------------------------------------------
# Wrapper
# ---------------------------------------------------------------------------

def sublayer_connection(x, a_2, b_2, w, wb, *, tm=None, tn=None,
                        mxu_dtype=None,
                        vmem_budget_bytes=48 << 20,
                        weight_resident_budget_bytes=16 << 20):
    """x: [B, S, D]. Returns x + Linear(LayerNorm(x)).

    LayerNorm follows the module's custom semantics: unbiased std (ddof=1),
    eps added to the std (NOT torch.nn.LayerNorm).  The sublayer matmul runs
    in `mxu_dtype` (default bfloat16, f32 accumulation); pass
    mxu_dtype=jnp.float32 for full precision.  The residual path stays f32.
    """
    B, S, D = x.shape
    assert D >= 2, "unbiased std needs at least 2 features"
    N = B * S
    out_dtype = x.dtype

    if mxu_dtype is None:
        mxu_dtype = jnp.bfloat16          # v6e/v7x bf16-native MXU default
    mxu_dtype = jnp.dtype(mxu_dtype)
    itm = jnp.dtype(x.dtype).itemsize
    itw = mxu_dtype.itemsize
    # bf16 packs 16 sublanes per vreg -> keep row tiles 16-aligned.
    align = 16 if (itw < 4 or itm < 4) else 8

    # ---- weight residency / column tiling -----------------------------------
    # Keep the whole (D, D) weight resident when its (double-buffered)
    # footprint fits a v7x-safe budget: the weight block index is then
    # constant over the entire grid and the matrix is DMA'd from HBM once.
    weight_resident = (2 * D * D * itw <= weight_resident_budget_bytes) or (D % 128 != 0)
    if weight_resident:
        tn_eff, nc = D, 1
    else:
        tn_eff = tn if tn is not None else 256
        tn_eff = max(128, (tn_eff // 128) * 128)
        while D % tn_eff != 0:
            tn_eff -= 128
        nc = D // tn_eff
        if nc == 1:
            weight_resident = True

    # ---- row tile ------------------------------------------------------------
    if tm is None:
        # When the weight is re-streamed once per row tile, a larger row tile
        # raises arithmetic intensity per weight byte (v5e/v6e want >= 512).
        tm = 256 if weight_resident else 512
    tm = max(align, min(_round_up(tm, align), _round_up(N, align)))
    # Keep at least two row tiles when possible so the "parallel" row axis can
    # shard across both v7x TensorCores.
    if N >= 2 * align:
        tm = min(tm, _round_up(pl.cdiv(N, 2), align))

    # ---- VMEM footprint / shrink tm if needed --------------------------------
    def _vmem_estimate(tm_):
        if weight_resident:
            return (2 * tm_ * D * itm          # x rows (double-buffered)
                    + 2 * D * D * itw          # resident weight
                    + 2 * tm_ * D * itm        # output tile
                    + 2 * 2 * D * 4 + 2 * D * 4
                    + 3 * tm_ * D * 4)         # f32 temporaries (diff/normed)
        return (2 * tm_ * D * itm              # full-width x tile
                + 2 * D * tn_eff * itw         # packed weight column tile
                + 2 * tm_ * tn_eff * itm       # output tile
                + 2 * 2 * D * 4 + 2 * tn_eff * 4
                + tm_ * D * itw                # normed scratch
                + 3 * tm_ * D * 4)             # f32 temporaries at j == 0

    while tm > 2 * align and _vmem_estimate(tm) > vmem_budget_bytes:
        tm = _round_up(max(align, tm // 2), align)
    # TODO(synk): for very large f32 D (>= 16K) on v7x, additionally consider
    # pipeline_mode=pl.Buffered(1) on the full-width x input.
    vmem_limit = int(max(_vmem_estimate(tm) + (8 << 20), 32 << 20))

    # ---- pad rows so every tile is full --------------------------------------
    Np = _round_up(N, tm)
    nr = Np // tm
    x2 = x.reshape(N, D)
    if Np != N:
        # Padded zero rows: var == 0, inv == 1/eps; the result stays finite
        # (diff == 0) and is sliced away below.  Latent overflow spot if eps
        # or the reciprocal path ever changes.
        x2 = jnp.pad(x2, ((0, Np - N), (0, 0)))

    a2 = a_2.reshape(1, D).astype(jnp.float32)
    b2 = b_2.reshape(1, D).astype(jnp.float32)
    wb2 = wb.reshape(1, D).astype(jnp.float32)
    w2 = w.astype(mxu_dtype)

    cost = pl.CostEstimate(
        flops=2 * N * D * D + 6 * N * D,
        transcendentals=2 * N,
        bytes_accessed=int(2 * N * D * itm
                           + (1 if weight_resident else nr) * D * D * itw
                           + 3 * D * 4 + D * itw),
    )

    if weight_resident:
        out = pl.pallas_call(
            _resident_kernel,
            out_shape=jax.ShapeDtypeStruct((Np, D), out_dtype),
            grid_spec=pltpu.PrefetchScalarGridSpec(
                num_scalar_prefetch=0,
                grid=(nr,),
                in_specs=[
                    pl.BlockSpec((tm, D), lambda i: (i, 0)),    # x rows
                    pl.BlockSpec((1, D), lambda i: (0, 0)),     # gamma
                    pl.BlockSpec((1, D), lambda i: (0, 0)),     # beta
                    pl.BlockSpec((D, D), lambda i: (0, 0)),     # whole weight (fetched once)
                    pl.BlockSpec((1, D), lambda i: (0, 0)),     # bias
                ],
                out_specs=pl.BlockSpec((tm, D), lambda i: (i, 0)),
            ),
            compiler_params=pltpu.CompilerParams(
                dimension_semantics=("parallel",),
                vmem_limit_bytes=vmem_limit,
            ),
            cost_estimate=cost,
        )(x2, a2, b2, w2, wb2)
    else:
        # Pre-pack the weight into contiguous (nc, D, tn) column tiles so each
        # DMA'd tile is a single contiguous HBM read.
        w_packed = jnp.transpose(w2.reshape(D, nc, tn_eff), (1, 0, 2))
        out = pl.pallas_call(
            _tiled_kernel,
            out_shape=jax.ShapeDtypeStruct((Np, D), out_dtype),
            grid_spec=pltpu.PrefetchScalarGridSpec(
                num_scalar_prefetch=0,
                grid=(nr, nc),
                in_specs=[
                    # Full-width rows; block index constant across j -> x is
                    # fetched from HBM once per row tile; residual columns are
                    # sliced in-VMEM inside the kernel.
                    pl.BlockSpec((tm, D), lambda i, j: (i, 0)),
                    pl.BlockSpec((1, D), lambda i, j: (0, 0)),          # gamma
                    pl.BlockSpec((1, D), lambda i, j: (0, 0)),          # beta
                    pl.BlockSpec((1, D, tn_eff), lambda i, j: (j, 0, 0)),  # packed W tile
                    pl.BlockSpec((1, tn_eff), lambda i, j: (0, j)),     # bias cols
                ],
                out_specs=pl.BlockSpec((tm, tn_eff), lambda i, j: (i, j)),
                scratch_shapes=[pltpu.VMEM((tm, D), mxu_dtype)],
            ),
            compiler_params=pltpu.CompilerParams(
                # Row axis shards across v7x's 2 TCs; the column axis carries
                # the normed-scratch dependency.
                dimension_semantics=("parallel", "arbitrary"),
                vmem_limit_bytes=vmem_limit,
            ),
            cost_estimate=cost,
        )(x2, a2, b2, w_packed, wb2)

    if Np != N:
        out = out[:N]
    return out.reshape(B, S, D)


def _reference(x, a_2, b_2, w, wb):
    mean = jnp.mean(x, axis=-1, keepdims=True)
    diff = x - mean
    var = jnp.sum(diff * diff, axis=-1, keepdims=True) / (x.shape[-1] - 1)
    std = jnp.sqrt(var)
    normed = a_2 * diff / (std + EPS) + b_2
    sub = jnp.dot(normed, w, precision=jax.lax.Precision.HIGHEST) + wb
    return x + sub


if __name__ == "__main__":
    # --- test 1: small shape consistent with the module (size = D features) --
    key = jax.random.PRNGKey(0)
    B, S, D = 2, 8, 32
    kx, kw, kb = jax.random.split(key, 3)
    x = jax.random.normal(kx, (B, S, D), dtype=jnp.float32)
    a_2 = jnp.ones((D,), dtype=jnp.float32)      # LayerNorm init: ones / zeros
    b_2 = jnp.zeros((D,), dtype=jnp.float32)
    w = jax.random.normal(kw, (D, D), dtype=jnp.float32) * 0.1
    wb = jax.random.normal(kb, (D,), dtype=jnp.float32) * 0.1
    ref = _reference(x, a_2, b_2, w, wb)

    # default (bf16 MXU, weight-resident path)
    out = jax.block_until_ready(sublayer_connection(x, a_2, b_2, w, wb))
    assert out.shape == (B, S, D)
    assert jnp.allclose(out, ref, atol=2e-2, rtol=2e-2)

    # full-precision MXU path
    out_f32 = jax.block_until_ready(
        sublayer_connection(x, a_2, b_2, w, wb, mxu_dtype=jnp.float32))
    assert jnp.allclose(out_f32, ref, atol=5e-3, rtol=5e-3)

    # --- test 2: row padding + nr >= 2, weight-resident path ------------------
    B2, S2, D2 = 2, 136, 256          # N = 272 (not a multiple of tm), D2 % 128 == 0
    k1, k2, k3, k4, k5 = jax.random.split(jax.random.PRNGKey(1), 5)
    x2 = jax.random.normal(k1, (B2, S2, D2), dtype=jnp.float32)
    a2p = 1.0 + 0.1 * jax.random.normal(k2, (D2,), dtype=jnp.float32)
    b2p = 0.1 * jax.random.normal(k3, (D2,), dtype=jnp.float32)
    w2 = jax.random.normal(k4, (D2, D2), dtype=jnp.float32) * 0.05
    wb2 = jax.random.normal(k5, (D2,), dtype=jnp.float32) * 0.05
    ref2 = _reference(x2, a2p, b2p, w2, wb2)

    out2 = jax.block_until_ready(sublayer_connection(x2, a2p, b2p, w2, wb2))
    assert out2.shape == (B2, S2, D2)
    assert jnp.allclose(out2, ref2, atol=2e-2, rtol=2e-2)

    # --- test 3: force the column-tiled path (packed weight, LN scratch) ------
    out3 = jax.block_until_ready(
        sublayer_connection(x2, a2p, b2p, w2, wb2, tn=128,
                            weight_resident_budget_bytes=0))
    assert out3.shape == (B2, S2, D2)
    assert jnp.allclose(out3, ref2, atol=2e-2, rtol=2e-2)

    # TODO(synk): the PyTorch module accepts an arbitrary `sublayer` callable
    # (and a dropout constructed as None); only a Linear sublayer is fused here.
    print("KERNEL_OK")
</pallas_src>

<mosaic_0001>
module attributes {stable_mosaic.version = 11 : i64} {
  func.func @_resident_kernel(%arg0: i32, %arg1: memref<16x32xf32, #tpu.memory_space<vmem>>, %arg2: memref<1x32xf32, #tpu.memory_space<vmem>>, %arg3: memref<1x32xf32, #tpu.memory_space<vmem>>, %arg4: memref<32x32xbf16, #tpu.memory_space<vmem>>, %arg5: memref<1x32xf32, #tpu.memory_space<vmem>>, %arg6: memref<16x32xf32, #tpu.memory_space<vmem>>) attributes {dimension_semantics = [#tpu.dimension_semantics<parallel>], iteration_bounds = array<i64: 1>, scalar_prefetch = 0 : i64, scratch_operands = 0 : i64, tpu.core_type = #tpu.core_type<tc>, window_params = [{transform_indices = @transform_0, window_bounds = array<i64: 16, 32>}, {pipeline_mode = #tpu.pipeline_mode<synchronous>, transform_indices = @transform_1, window_bounds = array<i64: 1, 32>}, {pipeline_mode = #tpu.pipeline_mode<synchronous>, transform_indices = @transform_2, window_bounds = array<i64: 1, 32>}, {pipeline_mode = #tpu.pipeline_mode<synchronous>, transform_indices = @transform_3, window_bounds = array<i64: 32, 32>}, {pipeline_mode = #tpu.pipeline_mode<synchronous>, transform_indices = @transform_4, window_bounds = array<i64: 1, 32>}, {transform_indices = @transform_5, window_bounds = array<i64: 16, 32>}]} {
    %c0 = arith.constant 0 : index
    %c0_0 = arith.constant 0 : index
    %0 = vector.load %arg1[%c0, %c0_0] : memref<16x32xf32, #tpu.memory_space<vmem>>, vector<16x32xf32>
    %cst = arith.constant dense<0.000000e+00> : vector<16xf32>
    %1 = vector.multi_reduction <add>, %0, %cst [1] : vector<16x32xf32> to vector<16xf32>
    %2 = vector.shape_cast %1 : vector<16xf32> to vector<16x1xf32>
    %cst_1 = arith.constant 3.200000e+01 : f32
    %3 = vector.broadcast %cst_1 : f32 to vector<16x1xf32>
    %4 = arith.divf %2, %3 : vector<16x1xf32>
    %5 = vector.broadcast %4 : vector<16x1xf32> to vector<16x32xf32>
    %6 = arith.subf %0, %5 : vector<16x32xf32>
    %7 = arith.mulf %6, %6 : vector<16x32xf32>
    %cst_2 = arith.constant dense<0.000000e+00> : vector<16xf32>
    %8 = vector.multi_reduction <add>, %7, %cst_2 [1] : vector<16x32xf32> to vector<16xf32>
    %9 = vector.shape_cast %8 : vector<16xf32> to vector<16x1xf32>
    %cst_3 = arith.constant 0.0322580636 : f32
    %10 = vector.broadcast %cst_3 : f32 to vector<16x1xf32>
    %11 = arith.mulf %9, %10 : vector<16x1xf32>
    %12 = math.sqrt %11 : vector<16x1xf32>
    %cst_4 = arith.constant 9.99999997E-7 : f32
    %13 = vector.broadcast %cst_4 : f32 to vector<16x1xf32>
    %14 = arith.addf %12, %13 : vector<16x1xf32>
    %15 = tpu.reciprocal %14 {approx = true} : vector<16x1xf32> -> vector<16x1xf32>
    %c0_5 = arith.constant 0 : index
    %c0_6 = arith.constant 0 : index
    %16 = vector.load %arg2[%c0_5, %c0_6] : memref<1x32xf32, #tpu.memory_space<vmem>>, vector<1x32xf32>
    %17 = vector.broadcast %15 : vector<16x1xf32> to vector<16x32xf32>
    %18 = arith.mulf %6, %17 : vector<16x32xf32>
    %19 = vector.broadcast %16 : vector<1x32xf32> to vector<16x32xf32>
    %20 = arith.mulf %19, %18 : vector<16x32xf32>
    %c0_7 = arith.constant 0 : index
    %c0_8 = arith.constant 0 : index
    %21 = vector.load %arg3[%c0_7, %c0_8] : memref<1x32xf32, #tpu.memory_space<vmem>>, vector<1x32xf32>
    %22 = vector.broadcast %21 : vector<1x32xf32> to vector<16x32xf32>
    %23 = arith.addf %20, %22 : vector<16x32xf32>
    %24 = arith.truncf %23 : vector<16x32xf32> to vector<16x32xbf16>
    %c0_9 = arith.constant 0 : index
    %c0_10 = arith.constant 0 : index
    %25 = vector.load %arg4[%c0_9, %c0_10] : memref<32x32xbf16, #tpu.memory_space<vmem>>, vector<32x32xbf16>
    %cst_11 = arith.constant dense<0.000000e+00> : vector<16x32xf32>
    %26 = tpu.matmul %24, %25, %cst_11 {dimension_numbers = #tpu.dot_dimension_numbers<[1], [0], [0], [1], [0, 0, 1, 1], [], []>} : vector<16x32xbf16>, vector<32x32xbf16>, vector<16x32xf32> -> vector<16x32xf32>
    %c0_12 = arith.constant 0 : index
    %c0_13 = arith.constant 0 : index
    %27 = vector.load %arg5[%c0_12, %c0_13] : memref<1x32xf32, #tpu.memory_space<vmem>>, vector<1x32xf32>
    %28 = vector.broadcast %27 : vector<1x32xf32> to vector<16x32xf32>
    %29 = arith.addf %26, %28 : vector<16x32xf32>
    %30 = arith.addf %0, %29 : vector<16x32xf32>
    %c0_14 = arith.constant 0 : index
    %c0_15 = arith.constant 0 : index
    %31 = vector.load %arg6[%c0_14, %c0_15] : memref<16x32xf32, #tpu.memory_space<vmem>>, vector<16x32xf32>
    tpu.vector_store %arg6[%c0_14, %c0_15], %30 {strides = array<i32>} : memref<16x32xf32, #tpu.memory_space<vmem>>, vector<16x32xf32>,
    return
  }
  func.func @transform_0(%arg0: i32) -> (i32, i32) {
    %c0_i32 = arith.constant 0 : i32
    %c0_i32_0 = arith.constant 0 : i32
    return %arg0, %c0_i32 : i32, i32
  }
  func.func @transform_1(%arg0: i32) -> (i32, i32) {
    %c0_i32 = arith.constant 0 : i32
    %c0_i32_0 = arith.constant 0 : i32
    %c0_i32_1 = arith.constant 0 : i32
    return %c0_i32, %c0_i32_0 : i32, i32
  }
  func.func @transform_2(%arg0: i32) -> (i32, i32) {
    %c0_i32 = arith.constant 0 : i32
    %c0_i32_0 = arith.constant 0 : i32
    %c0_i32_1 = arith.constant 0 : i32
    return %c0_i32, %c0_i32_0 : i32, i32
  }
  func.func @transform_3(%arg0: i32) -> (i32, i32) {
    %c0_i32 = arith.constant 0 : i32
    %c0_i32_0 = arith.constant 0 : i32
    %c0_i32_1 = arith.constant 0 : i32
    return %c0_i32, %c0_i32_0 : i32, i32
  }
  func.func @transform_4(%arg0: i32) -> (i32, i32) {
    %c0_i32 = arith.constant 0 : i32
    %c0_i32_0 = arith.constant 0 : i32
    %c0_i32_1 = arith.constant 0 : i32
    return %c0_i32, %c0_i32_0 : i32, i32
  }
  func.func @transform_5(%arg0: i32) -> (i32, i32) {
    %c0_i32 = arith.constant 0 : i32
    %c0_i32_0 = arith.constant 0 : i32
    return %arg0, %c0_i32 : i32, i32
  }
}

</mosaic_0001>

<llo_original>
// kernel: tpu_custom_call.1
$region0: #{tpu_custom_call.1}
  #allocation0 [shape = 'u32[]', space=smem, size = 0x4, offset = 0x4, fixed_abs, tag = 'smem constant byte address 0x4 - core index']
  #allocation1 [shape = 'u32[144,128]{1,0:T(1,128)}', space=vmem, size = 0x12000, scoped, tag = 'internal scratch']
  %s0 = inlined_call_operand.hbm [shape: f32[16,32], index: 0, kind: input, shape index: {}]
  %s1 = inlined_call_operand.vmem [shape: f32[1,32], index: 1, kind: input, shape index: {}]
  %s2 = inlined_call_operand.vmem [shape: f32[1,32], index: 2, kind: input, shape index: {}]
  %s3 = inlined_call_operand.hbm [shape: bf16[32,32], index: 3, kind: input, shape index: {}]
  %s4 = inlined_call_operand.vmem [shape: f32[1,32], index: 4, kind: input, shape index: {}]
  %s5 = inlined_call_operand.hbm [shape: f32[16,32], index: 5, kind: output, shape index: {}]
  %s6 = sld [smem:[#allocation0]]
  $region38: #{tpu_custom_call.1} parent=0
    _
  %s8 = ssub.s32 1, %s6
  %s9 = scalar_select 0, %s8, %s6
  $region1: #{tpu_custom_call.1} parent=0
    #allocation2 [shape = 'u8[8192]{0}', space=vmem, size = 0x2000, scoped, tag = 'input window, operand 0, single buffered']
    #allocation3 [shape = 's32[1]{0}', space=sflag, size = 0x4, scoped, tag = 'scoped memory for tpu_custom_call.1']
    #allocation4 [shape = 's32[1]{0}', space=sflag, size = 0x4, scoped, tag = 'scoped memory for tpu_custom_call.1']
    #allocation5 [shape = 'u8[8192]{0}', space=vmem, size = 0x2000, scoped, tag = 'input window, operand 3, single buffered']
    #allocation6 [shape = 's32[1]{0}', space=sflag, size = 0x4, scoped, tag = 'scoped memory for tpu_custom_call.1']
    #allocation7 [shape = 'u8[8192]{0}', space=vmem, size = 0x2000, scoped, tag = 'output window, operand 0, single buffered']
    %10 = vsyncpa [#allocation3], 0
    %11 = vsyncpa [#allocation6], 0
    %12 = vsyncpa [#allocation4], 0
    // Predicated region
    $region2: #{tpu_custom_call.1} parent=1 // pred_check
      _
    $region3: #{tpu_custom_call.1} parent=1 // pred_check_branch
      %14 = sbr.rel (0) target = $region5
    $region4: #{tpu_custom_call.1} parent=1 // pred_region
      %s16 = ssub.s32 256, 256
      %17 = vsyncadd [#allocation3], %s16
      %s18 = sshll.u32 [#allocation2], 4
      %s19 = int_to_ptr.vmem [resolvable:$true] %s18
      %24 = dma.hbm_to_vmem [thread:$0]  %s0, 256, %s19, [#allocation3], 128, 128, 8
    $region5: #{tpu_custom_call.1} parent=1 // pred_fallthru
      _
    // Predicated region
    $region6: #{tpu_custom_call.1} parent=1 // pred_check
      _
    $region7: #{tpu_custom_call.1} parent=1 // pred_check_branch
      %26 = sbr.rel (0) target = $region9
    $region8: #{tpu_custom_call.1} parent=1 // pred_region
      _
    $region9: #{tpu_custom_call.1} parent=1 // pred_fallthru
      _
    // Predicated region
    $region10: #{tpu_custom_call.1} parent=1 // pred_check
      _
    $region11: #{tpu_custom_call.1} parent=1 // pred_check_branch
      %28 = sbr.rel (0) target = $region13
    $region12: #{tpu_custom_call.1} parent=1 // pred_region
      _
    $region13: #{tpu_custom_call.1} parent=1 // pred_fallthru
      _
    // Predicated region
    $region14: #{tpu_custom_call.1} parent=1 // pred_check
      _
    $region15: #{tpu_custom_call.1} parent=1 // pred_check_branch
      %30 = sbr.rel (0) target = $region17
    $region16: #{tpu_custom_call.1} parent=1 // pred_region
      %s32 = ssub.s32 256, 256
      %33 = vsyncadd [#allocation6], %s32
      %s34 = sshll.u32 [#allocation5], 4
      %s35 = int_to_ptr.vmem [resolvable:$true] %s34
      %40 = dma.hbm_to_vmem [thread:$0]  %s3, 256, %s35, [#allocation6], 64, 64, 4
    $region17: #{tpu_custom_call.1} parent=1 // pred_fallthru
      _
    // Predicated region
    $region18: #{tpu_custom_call.1} parent=1 // pred_check
      _
    $region19: #{tpu_custom_call.1} parent=1 // pred_check_branch
      %42 = sbr.rel (0) target = $region21
    $region20: #{tpu_custom_call.1} parent=1 // pred_region
      _
    $region21: #{tpu_custom_call.1} parent=1 // pred_fallthru
      _
    // Predicated region
    $region22: #{tpu_custom_call.1} parent=1 // pred_check
      _
    $region23: #{tpu_custom_call.1} parent=1 // pred_check_branch
      %44 = sbr.rel (0) target = $region25
    $region24: #{tpu_custom_call.1} parent=1 // pred_region
      %45 = dma.done [#allocation3], 256
    $region25: #{tpu_custom_call.1} parent=1 // pred_fallthru
      _
    // Predicated region
    $region26: #{tpu_custom_call.1} parent=1 // pred_check
      _
    $region27: #{tpu_custom_call.1} parent=1 // pred_check_branch
      %47 = sbr.rel (0) target = $region29
    $region28: #{tpu_custom_call.1} parent=1 // pred_region
      %48 = dma.done [#allocation6], 256
    $region29: #{tpu_custom_call.1} parent=1 // pred_fallthru
      _
    %v50 = vld [vmem:[#allocation2] sm:$0xff]
    %v51 = vld [vmem:[#allocation2 + $0x8] sm:$0xff]
    %vm52 = vcmask 261120
    %v53 = vsel %vm52, %v50, 0.0
    %54 = vadd.xlane.f32.xlu0 %v53
    %v55 = vpop.xlane.xlu0 %54
    %v56 = vsel %vm52, %v51, 0.0
    %57 = vadd.xlane.f32.xlu0 %v56
    %v58 = vpop.xlane.xlu0 %57
    %v59 = vrcp.pop 32.0
    %v60 = vmul.f32 %v55, %v59
    %v61 = vmul.f32 %v58, %v59
    %v62 = vsub.f32 %v50, %v60
    %v63 = vsub.f32 %v51, %v61
    %v64 = vmul.f32 %v62, %v62
    %v65 = vmul.f32 %v63, %v63
    %v66 = vsel %vm52, %v64, 0.0
    %67 = vadd.xlane.f32.xlu0 %v66
    %v68 = vpop.xlane.xlu0 %67
    %v69 = vsel %vm52, %v65, 0.0
    %70 = vadd.xlane.f32.xlu0 %v69
    %v71 = vpop.xlane.xlu0 %70
    %v72 = vmul.f32 %v68, 0.032258064
    %v73 = vmul.f32 %v71, 0.032258064
    %v74 = vrsqrt.pop %v72
    %v75 = vmul.f32 %v72, %v74
    %vm76 = vcmp.eq.f32.partialorder %v72, inf
    %v77 = vsel %vm76, %v72, %v75
    %vm78 = vcmp.eq.f32.partialorder %v72, 0.0
    %v79 = vand.u32 %v72, 2147483648
    %v80 = vsel %vm78, %v79, %v77
    %v81 = vrsqrt.pop %v73
    %v82 = vmul.f32 %v73, %v81
    %vm83 = vcmp.eq.f32.partialorder %v73, inf
    %v84 = vsel %vm83, %v73, %v82
    %vm85 = vcmp.eq.f32.partialorder %v73, 0.0
    %v86 = vand.u32 %v73, 2147483648
    %v87 = vsel %vm85, %v86, %v84
    %v88 = vadd.f32 %v80, 1e-06
    %v89 = vadd.f32 %v87, 1e-06
    %v90 = vrcp.pop %v88
    %v91 = vrcp.pop %v89
    %v92 = vld [vmem:[%s1] sm:$0x1]
    %v93 = vmul.f32 %v62, %v90
    %v94 = vmul.f32 %v63, %v91
    %v96 = vlaneseq
    %v97 = vshrl.u32 %v96, 7
    %v98 = vsub.s32 0, %v97
    %v99 = vrot.slane %v92, %v98
    %v101 = vmul.f32 %v99, %v93
    %v102 = vmul.f32 %v99, %v94
    %v103 = vld [vmem:[%s2] sm:$0x1]
    %v105 = vlaneseq
    %v106 = vshrl.u32 %v105, 7
    %v107 = vsub.s32 0, %v106
    %v108 = vrot.slane %v103, %v107
    %v110 = vadd.f32 %v101, %v108
    %v111 = vadd.f32 %v102, %v108
    %v112 = vpack.c.bf16 %v111, %v110
    %v113 = vld [vmem:[#allocation5] sm:$0xf]
    %v114 = vld [vmem:[#allocation5 + $0x4] sm:$0xf]
    %v115 = vld [vmem:[#allocation5 + $0x8] sm:$0xf]
    %v116 = vld [vmem:[#allocation5 + $0xc] sm:$0xf]
    %v117 = vld [vmem:[%s4] sm:$0x1]
    %v119 = vlaneseq
    %v120 = vshrl.u32 %v119, 7
    %v121 = vsub.s32 0, %v120
    %v122 = vrot.slane %v117, %v121
    %v128 = vunpack.c.l.b16 %v113
    %v129 = vunpack.c.l.b16 %v114
    %v130 = vunpack.c.l.b16 %v115
    %v131 = vunpack.c.l.b16 %v116
    %v132 = vpack.c.b16 %v129, %v128
    %v133 = vpack.c.b16 %v131, %v130
    %v137 = vsel %vm52, %v112, 0
    %139 = vmatprep.subr.bf16.mxu0 0
    %140 = vmatpush1.bf16.msra.mxu0 %v132
    %141 = vmatprep.subr.bf16.mxu0 0
    %142 = vmatpush1.bf16.msra.mxu0 %v133
    %143 = vmatprep.subr.bf16.mxu0 0
    %144 = vmatpush1.bf16.msra.mxu0 0
    %145 = vmatprep.subr.bf16.mxu0 0
    %146 = vmatpush1.bf16.msra.mxu0 0
    %147 = vmatprep.subr.bf16.mxu0 0
    %148 = vmatpush1.bf16.msra.mxu0 0
    %149 = vmatprep.subr.bf16.mxu0 0
    %150 = vmatpush1.bf16.msra.mxu0 0
    %151 = vmatprep.subr.bf16.mxu0 0
    %152 = vmatpush1.bf16.msra.mxu0 0
    %153 = vmatprep.subr.bf16.mxu0 0
    %154 = vmatpush1.bf16.msra.mxu0 0
    %155 = vmatprep.subr.bf16.mxu0 0
    %156 = vmatpush1.bf16.msra.mxu0 0
    %157 = vmatprep.subr.bf16.mxu0 0
    %158 = vmatpush1.bf16.msra.mxu0 0
    %159 = vmatprep.subr.bf16.mxu0 0
    %160 = vmatpush1.bf16.msra.mxu0 0
    %161 = vmatprep.subr.bf16.mxu0 0
    %162 = vmatpush1.bf16.msra.mxu0 0
    %163 = vmatprep.subr.bf16.mxu0 0
    %164 = vmatpush1.bf16.msra.mxu0 0
    %165 = vmatprep.subr.bf16.mxu0 0
    %166 = vmatpush1.bf16.msra.mxu0 0
    %167 = vmatprep.subr.bf16.mxu0 0
    %168 = vmatpush1.bf16.msra.mxu0 0
    %169 = vmatprep.subr.bf16.mxu0 0
    %170 = vmatpush1.bf16.msra.mxu0 0
    %171 = vmatprep.mubr.bf16.mxu0 0
    %172 = vmatmul.mubr.bf16.gmra.mrb[0].mxu0 %v137
    %v173 = vpop.f32.mrb[0].mxu0
    %v174 = vadd.f32 %v122, %v173
    %v175 = vpop.f32.mrb[0].mxu0
    %v176 = vpop.f32.mrb[0].mxu0
    %v177 = vadd.f32 %v122, %v176
    %v178 = vpop.f32.mrb[0].mxu0
    %179 = vdwg.mxu0
    %v180 = vadd.f32 %v50, %v174
    %v181 = vadd.f32 %v51, %v177
    %182 = vst.msk [vmem:[#allocation7] sm:$0xff] %vm52, %v180
    %183 = vst.msk [vmem:[#allocation7 + $0x8] sm:$0xff] %vm52, %v181
    // Predicated region
    $region30: #{tpu_custom_call.1} parent=1 // pred_check
      _
    $region31: #{tpu_custom_call.1} parent=1 // pred_check_branch
      %185 = sbr.rel (0) target = $region33
    $region32: #{tpu_custom_call.1} parent=1 // pred_region
      %s187 = ssub.s32 256, 256
      %188 = vsyncadd [#allocation4], %s187
      %s189 = sshll.u32 [#allocation7], 4
      %s190 = int_to_ptr.vmem [resolvable:$true] %s189
      %195 = dma.vmem_to_hbm [thread:$0]  %s190, 256, %s5, [#allocation4], 128, 128, 8
    $region33: #{tpu_custom_call.1} parent=1 // pred_fallthru
      _
    // Predicated region
    $region34: #{tpu_custom_call.1} parent=1 // pred_check
      _
    $region35: #{tpu_custom_call.1} parent=1 // pred_check_branch
      %197 = sbr.rel (0) target = $region37
    $region36: #{tpu_custom_call.1} parent=1 // pred_region
      %198 = dma.done [#allocation4], 256
    $region37: #{tpu_custom_call.1} parent=1 // pred_fallthru
      _
    %199 = vsyncpa [#allocation3], 1
    %200 = vsyncpa [#allocation6], 1
    %201 = vsyncpa [#allocation4], 1

</llo_original>
